<compile_context>
chip_gen: v5e
topology: v5e:2x2
jax: 0.10.0
libtpu: 0.0.40
codegen_flags: <defaults>
</compile_context>

<pallas_src>
import functools

import jax
import jax.numpy as jnp
from jax.experimental import pallas as pl
from jax.experimental.pallas import tpu as pltpu


# =============================================================================
# Path A: weights fully resident in VMEM, grid over row tiles only.
# =============================================================================
def _ffn_resident_kernel(x_ref, w1_ref, b1_ref, w2_ref, b2_ref, o_ref,
                         acc_ref, *, tf):
    # x_ref:  (tm, d_model)        compute dtype (bf16 by default)
    # w1_ref: (d_model, d_ff_p)    full W1, resident across the grid
    # b1_ref: (1, d_ff_p)          f32
    # w2_ref: (d_ff_p, d_model)    full W2, resident across the grid
    # b2_ref: (1, d_model)         f32
    # o_ref:  (tm, d_model)
    # acc_ref:(tm, d_model) f32    accumulator scratch
    d_ff_p = w1_ref.shape[1]
    nf = d_ff_p // tf
    acc_ref[...] = jnp.zeros_like(acc_ref)
    for c in range(nf):                      # static chunk loop, small count
        lo = c * tf
        h = jnp.dot(x_ref[...], w1_ref[:, lo:lo + tf],
                    preferred_element_type=jnp.float32)
        h = jnp.maximum(h + b1_ref[:, lo:lo + tf].astype(jnp.float32), 0.0)
        # dropout == identity (inference).
        acc_ref[...] += jnp.dot(h.astype(w2_ref.dtype), w2_ref[lo:lo + tf, :],
                                preferred_element_type=jnp.float32)
    o_ref[...] = (acc_ref[...]
                  + b2_ref[...].astype(jnp.float32)).astype(o_ref.dtype)


# =============================================================================
# Path B: stream (d_model, tf)/(tf, d_model) weight slices over a 2-D grid.
# =============================================================================
def _ffn_streaming_kernel(x_ref, w1_ref, b1_ref, w2_ref, b2_ref, o_ref,
                          acc_ref):
    f = pl.program_id(1)

    @pl.when(f == 0)
    def _init():
        acc_ref[...] = jnp.zeros_like(acc_ref)

    h = jnp.dot(x_ref[...], w1_ref[...], preferred_element_type=jnp.float32)
    h = jnp.maximum(h + b1_ref[...].astype(jnp.float32), 0.0)
    # dropout == identity (inference).
    acc_ref[...] += jnp.dot(h.astype(w2_ref.dtype), w2_ref[...],
                            preferred_element_type=jnp.float32)

    @pl.when(f == pl.num_programs(1) - 1)
    def _finalize():
        o_ref[...] = (acc_ref[...]
                      + b2_ref[...].astype(jnp.float32)).astype(o_ref.dtype)


# =============================================================================
# VMEM estimates + tile choice.
# =============================================================================
_BUDGET = 40 * (1 << 20)   # conservative: fits v7x's 64 MiB physical VMEM


def _est_resident(tm, tf, d_model, d_ff_p, cbytes, obytes):
    return (2 * tm * d_model * cbytes          # x tiles (double-buffered)
            + 2 * tm * d_model * obytes        # out tiles
            + 2 * d_model * d_ff_p * cbytes    # W1 (buffered, resident)
            + 2 * d_ff_p * 4                   # b1
            + 2 * d_ff_p * d_model * cbytes    # W2
            + 2 * d_model * 4                  # b2
            + tm * d_model * 4                 # f32 accumulator
            + tm * tf * (4 + cbytes))          # hidden-chunk temporaries


def _est_streaming(tm, tf, d_model, cbytes, obytes):
    return (2 * tm * d_model * cbytes + 2 * tm * d_model * obytes
            + 2 * d_model * tf * cbytes + 2 * tf * d_model * cbytes
            + 2 * tf * 4 + 2 * d_model * 4
            + tm * d_model * 4)


def _choose_streaming_tiles(M, d_model, d_ff, cbytes, obytes):
    tm = M if M <= 512 else 512
    tf = d_ff if d_ff <= 2048 else 2048
    while _est_streaming(tm, tf, d_model, cbytes, obytes) > _BUDGET and tf > 128:
        tf = max(128, (tf // 2) // 128 * 128)
    while _est_streaming(tm, tf, d_model, cbytes, obytes) > _BUDGET and tm > 128:
        tm = max(128, (tm // 2) // 128 * 128)
    return tm, tf


def _pad_dff(w1c, b1_2d, w2c, d_ff, d_ff_p):
    """Zero-pad the d_ff axis so padded columns/rows contribute exactly 0."""
    if d_ff_p == d_ff:
        return w1c, b1_2d, w2c
    pad = d_ff_p - d_ff
    return (jnp.pad(w1c, ((0, 0), (0, pad))),
            jnp.pad(b1_2d, ((0, 0), (0, pad))),
            jnp.pad(w2c, ((0, pad), (0, 0))))


# =============================================================================
# Public wrapper.
# =============================================================================
def positionwise_feed_forward(x, w1, b1, w2, b2, *,
                              compute_dtype=jnp.bfloat16,
                              tm=None, tf=None):
    """x: [..., d_model]; w1: [d_model, d_ff]; w2: [d_ff, d_model].

    Weights are stored (in, out), i.e. transposed vs. PyTorch nn.Linear.weight.
    Passing tm/tf explicitly forces the streaming (2-D grid) path.
    """
    *lead, d_model = x.shape
    d_ff = w1.shape[1]
    M = 1
    for d in lead:
        M *= d
    out_dtype = x.dtype
    cbytes = jnp.dtype(compute_dtype).itemsize
    obytes = jnp.dtype(out_dtype).itemsize

    x2d = x.reshape(M, d_model).astype(compute_dtype)
    w1c = w1.astype(compute_dtype)
    w2c = w2.astype(compute_dtype)
    b1_2d = b1.reshape(1, d_ff).astype(jnp.float32)
    b2_2d = b2.reshape(1, d_model).astype(jnp.float32)

    # ---------------- Path A: weights resident in VMEM ----------------
    if tm is None and tf is None:
        tm_a = M if M <= 512 else 512
        tf_a = d_ff if d_ff <= 512 else 512
        d_ff_a = pl.cdiv(d_ff, tf_a) * tf_a
        while (_est_resident(tm_a, tf_a, d_model, d_ff_a, cbytes, obytes)
               > _BUDGET and tm_a > 128):
            tm_a = max(128, ((tm_a // 2) + 7) // 8 * 8)
        est_a = _est_resident(tm_a, tf_a, d_model, d_ff_a, cbytes, obytes)
        if est_a <= _BUDGET:
            w1p, b1p, w2p = _pad_dff(w1c, b1_2d, w2c, d_ff, d_ff_a)
            vmem_limit = int(min(60 << 20, max(32 << 20, est_a + (8 << 20))))
            out = pl.pallas_call(
                functools.partial(_ffn_resident_kernel, tf=tf_a),
                out_shape=jax.ShapeDtypeStruct((M, d_model), out_dtype),
                grid_spec=pltpu.PrefetchScalarGridSpec(
                    num_scalar_prefetch=0,
                    grid=(pl.cdiv(M, tm_a),),
                    in_specs=[
                        pl.BlockSpec((tm_a, d_model), lambda i: (i, 0)),   # x
                        pl.BlockSpec((d_model, d_ff_a), lambda i: (0, 0)),  # W1
                        pl.BlockSpec((1, d_ff_a), lambda i: (0, 0)),        # b1
                        pl.BlockSpec((d_ff_a, d_model), lambda i: (0, 0)),  # W2
                        pl.BlockSpec((1, d_model), lambda i: (0, 0)),       # b2
                    ],
                    out_specs=pl.BlockSpec((tm_a, d_model), lambda i: (i, 0)),
                    scratch_shapes=[pltpu.VMEM((tm_a, d_model), jnp.float32)],
                ),
                compiler_params=pltpu.CompilerParams(
                    dimension_semantics=("parallel",),
                    vmem_limit_bytes=vmem_limit,
                ),
            )(x2d, w1p, b1p, w2p, b2_2d)
            return out.reshape(*lead, d_model)

    # ---------------- Path B: stream weight slices (2-D grid) ----------------
    auto_tm, auto_tf = _choose_streaming_tiles(M, d_model, d_ff, cbytes, obytes)
    if tm is None:
        tm = auto_tm
    if tf is None:
        tf = auto_tf
    d_ff_p = pl.cdiv(d_ff, tf) * tf
    w1p, b1p, w2p = _pad_dff(w1c, b1_2d, w2c, d_ff, d_ff_p)

    est_b = _est_streaming(tm, tf, d_model, cbytes, obytes)
    vmem_limit = int(min(60 << 20, max(32 << 20, est_b + (8 << 20))))
    grid = (pl.cdiv(M, tm), d_ff_p // tf)   # f innermost: acc resident over f

    out = pl.pallas_call(
        _ffn_streaming_kernel,
        out_shape=jax.ShapeDtypeStruct((M, d_model), out_dtype),
        grid_spec=pltpu.PrefetchScalarGridSpec(
            num_scalar_prefetch=0,
            grid=grid,
            in_specs=[
                pl.BlockSpec((tm, d_model), lambda i, f: (i, 0)),     # x rows
                pl.BlockSpec((d_model, tf), lambda i, f: (0, f)),     # W1 slice
                pl.BlockSpec((1, tf), lambda i, f: (0, f)),           # b1 slice
                pl.BlockSpec((tf, d_model), lambda i, f: (f, 0)),     # W2 slice
                pl.BlockSpec((1, d_model), lambda i, f: (0, 0)),      # b2
            ],
            out_specs=pl.BlockSpec((tm, d_model), lambda i, f: (i, 0)),
            scratch_shapes=[pltpu.VMEM((tm, d_model), jnp.float32)],
        ),
        compiler_params=pltpu.CompilerParams(
            dimension_semantics=("parallel", "arbitrary"),
            vmem_limit_bytes=vmem_limit,
        ),
    )(x2d, w1p, b1p, w2p, b2_2d)

    return out.reshape(*lead, d_model)


# =============================================================================
# Demo / correctness checks.
# =============================================================================
if __name__ == "__main__":
    key = jax.random.PRNGKey(0)

    def make_params(k, d_model, d_ff):
        kw1, kb1, kw2, kb2 = jax.random.split(k, 4)
        b1_bound = 1.0 / (d_model ** 0.5)
        b2_bound = 1.0 / (d_ff ** 0.5)
        w1 = jax.random.uniform(kw1, (d_model, d_ff), jnp.float32,
                                -b1_bound, b1_bound)
        b1 = jax.random.uniform(kb1, (d_ff,), jnp.float32, -b1_bound, b1_bound)
        w2 = jax.random.uniform(kw2, (d_ff, d_model), jnp.float32,
                                -b2_bound, b2_bound)
        b2 = jax.random.uniform(kb2, (d_model,), jnp.float32,
                                -b2_bound, b2_bound)
        return w1, b1, w2, b2

    # --- Case 1: small transformer-style shapes, resident-weights path ---
    B, S, d_model, d_ff = 2, 8, 32, 64
    kx, kp = jax.random.split(key)
    x = jax.random.normal(kx, (B, S, d_model), dtype=jnp.float32)
    w1, b1, w2, b2 = make_params(kp, d_model, d_ff)
    ref = jnp.maximum(x @ w1 + b1, 0.0) @ w2 + b2   # dropout == identity

    y32 = jax.block_until_ready(
        positionwise_feed_forward(x, w1, b1, w2, b2,
                                  compute_dtype=jnp.float32))
    assert y32.shape == (B, S, d_model) and y32.dtype == x.dtype
    assert jnp.allclose(y32, ref, atol=1e-5, rtol=1e-5), "f32 resident mismatch"

    y16 = jax.block_until_ready(positionwise_feed_forward(x, w1, b1, w2, b2))
    assert y16.shape == (B, S, d_model) and y16.dtype == x.dtype
    assert jnp.allclose(y16, ref, atol=3e-2, rtol=3e-2), "bf16 resident mismatch"

    # --- Case 2: force the streaming path (explicit tm/tf, multi-step grid) ---
    d_model2, d_ff2 = 32, 256
    kx2, kp2 = jax.random.split(kp)
    x2 = jax.random.normal(kx2, (B, S, d_model2), dtype=jnp.float32)
    w1b, b1b, w2b, b2b = make_params(kp2, d_model2, d_ff2)
    ref2 = jnp.maximum(x2 @ w1b + b1b, 0.0) @ w2b + b2b

    y2 = jax.block_until_ready(
        positionwise_feed_forward(x2, w1b, b1b, w2b, b2b,
                                  compute_dtype=jnp.float32, tm=8, tf=128))
    assert y2.shape == (B, S, d_model2) and y2.dtype == x2.dtype
    assert jnp.allclose(y2, ref2, atol=1e-5, rtol=1e-5), "streaming mismatch"

    print("KERNEL_OK")
</pallas_src>

<mosaic_0001>
module attributes {stable_mosaic.version = 11 : i64} {
  func.func @_ffn_resident_kernel(%arg0: i32, %arg1: memref<16x32xf32, #tpu.memory_space<vmem>>, %arg2: memref<32x64xf32, #tpu.memory_space<vmem>>, %arg3: memref<1x64xf32, #tpu.memory_space<vmem>>, %arg4: memref<64x32xf32, #tpu.memory_space<vmem>>, %arg5: memref<1x32xf32, #tpu.memory_space<vmem>>, %arg6: memref<16x32xf32, #tpu.memory_space<vmem>>, %arg7: memref<16x32xf32, #tpu.memory_space<vmem>>) attributes {dimension_semantics = [#tpu.dimension_semantics<parallel>], iteration_bounds = array<i64: 1>, scalar_prefetch = 0 : i64, scratch_operands = 1 : i64, tpu.core_type = #tpu.core_type<tc>, window_params = [{transform_indices = @transform_0, window_bounds = array<i64: 16, 32>}, {pipeline_mode = #tpu.pipeline_mode<synchronous>, transform_indices = @transform_1, window_bounds = array<i64: 32, 64>}, {pipeline_mode = #tpu.pipeline_mode<synchronous>, transform_indices = @transform_2, window_bounds = array<i64: 1, 64>}, {pipeline_mode = #tpu.pipeline_mode<synchronous>, transform_indices = @transform_3, window_bounds = array<i64: 64, 32>}, {pipeline_mode = #tpu.pipeline_mode<synchronous>, transform_indices = @transform_4, window_bounds = array<i64: 1, 32>}, {transform_indices = @transform_5, window_bounds = array<i64: 16, 32>}]} {
    %cst = arith.constant 0.000000e+00 : f32
    %0 = vector.broadcast %cst : f32 to vector<16x32xf32>
    %c0 = arith.constant 0 : index
    %c0_0 = arith.constant 0 : index
    %1 = vector.load %arg7[%c0, %c0_0] : memref<16x32xf32, #tpu.memory_space<vmem>>, vector<16x32xf32>
    tpu.vector_store %arg7[%c0, %c0_0], %0 {strides = array<i32>} : memref<16x32xf32, #tpu.memory_space<vmem>>, vector<16x32xf32>,
    %c0_1 = arith.constant 0 : index
    %c0_2 = arith.constant 0 : index
    %2 = vector.load %arg1[%c0_1, %c0_2] : memref<16x32xf32, #tpu.memory_space<vmem>>, vector<16x32xf32>
    %c0_3 = arith.constant 0 : index
    %c0_4 = arith.constant 0 : index
    %3 = vector.load %arg2[%c0_3, %c0_4] : memref<32x64xf32, #tpu.memory_space<vmem>>, vector<32x64xf32>
    %cst_5 = arith.constant dense<0.000000e+00> : vector<16x64xf32>
    %4 = tpu.matmul %2, %3, %cst_5 {dimension_numbers = #tpu.dot_dimension_numbers<[1], [0], [0], [1], [0, 0, 1, 1], [], []>} : vector<16x32xf32>, vector<32x64xf32>, vector<16x64xf32> -> vector<16x64xf32>
    %c0_6 = arith.constant 0 : index
    %c0_7 = arith.constant 0 : index
    %5 = vector.load %arg3[%c0_6, %c0_7] : memref<1x64xf32, #tpu.memory_space<vmem>>, vector<1x64xf32>
    %6 = vector.broadcast %5 : vector<1x64xf32> to vector<16x64xf32>
    %7 = arith.addf %4, %6 : vector<16x64xf32>
    %cst_8 = arith.constant 0.000000e+00 : f32
    %8 = vector.broadcast %cst_8 : f32 to vector<16x64xf32>
    %9 = arith.maximumf %7, %8 : vector<16x64xf32>
    %c0_9 = arith.constant 0 : index
    %c0_10 = arith.constant 0 : index
    %10 = vector.load %arg7[%c0_9, %c0_10] : memref<16x32xf32, #tpu.memory_space<vmem>>, vector<16x32xf32>
    %c0_11 = arith.constant 0 : index
    %c0_12 = arith.constant 0 : index
    %11 = vector.load %arg4[%c0_11, %c0_12] : memref<64x32xf32, #tpu.memory_space<vmem>>, vector<64x32xf32>
    %cst_13 = arith.constant dense<0.000000e+00> : vector<16x32xf32>
    %12 = tpu.matmul %9, %11, %cst_13 {dimension_numbers = #tpu.dot_dimension_numbers<[1], [0], [0], [1], [0, 0, 1, 1], [], []>} : vector<16x64xf32>, vector<64x32xf32>, vector<16x32xf32> -> vector<16x32xf32>
    %13 = arith.addf %10, %12 : vector<16x32xf32>
    %c0_14 = arith.constant 0 : index
    %c0_15 = arith.constant 0 : index
    %14 = vector.load %arg7[%c0_14, %c0_15] : memref<16x32xf32, #tpu.memory_space<vmem>>, vector<16x32xf32>
    tpu.vector_store %arg7[%c0_14, %c0_15], %13 {strides = array<i32>} : memref<16x32xf32, #tpu.memory_space<vmem>>, vector<16x32xf32>,
    %c0_16 = arith.constant 0 : index
    %c0_17 = arith.constant 0 : index
    %15 = vector.load %arg7[%c0_16, %c0_17] : memref<16x32xf32, #tpu.memory_space<vmem>>, vector<16x32xf32>
    %c0_18 = arith.constant 0 : index
    %c0_19 = arith.constant 0 : index
    %16 = vector.load %arg5[%c0_18, %c0_19] : memref<1x32xf32, #tpu.memory_space<vmem>>, vector<1x32xf32>
    %17 = vector.broadcast %16 : vector<1x32xf32> to vector<16x32xf32>
    %18 = arith.addf %15, %17 : vector<16x32xf32>
    %c0_20 = arith.constant 0 : index
    %c0_21 = arith.constant 0 : index
    %19 = vector.load %arg6[%c0_20, %c0_21] : memref<16x32xf32, #tpu.memory_space<vmem>>, vector<16x32xf32>
    tpu.vector_store %arg6[%c0_20, %c0_21], %18 {strides = array<i32>} : memref<16x32xf32, #tpu.memory_space<vmem>>, vector<16x32xf32>,
    return
  }
  func.func @transform_0(%arg0: i32) -> (i32, i32) {
    %c0_i32 = arith.constant 0 : i32
    %c0_i32_0 = arith.constant 0 : i32
    return %arg0, %c0_i32 : i32, i32
  }
  func.func @transform_1(%arg0: i32) -> (i32, i32) {
    %c0_i32 = arith.constant 0 : i32
    %c0_i32_0 = arith.constant 0 : i32
    %c0_i32_1 = arith.constant 0 : i32
    return %c0_i32, %c0_i32_0 : i32, i32
  }
  func.func @transform_2(%arg0: i32) -> (i32, i32) {
    %c0_i32 = arith.constant 0 : i32
    %c0_i32_0 = arith.constant 0 : i32
    %c0_i32_1 = arith.constant 0 : i32
    return %c0_i32, %c0_i32_0 : i32, i32
  }
  func.func @transform_3(%arg0: i32) -> (i32, i32) {
    %c0_i32 = arith.constant 0 : i32
    %c0_i32_0 = arith.constant 0 : i32
    %c0_i32_1 = arith.constant 0 : i32
    return %c0_i32, %c0_i32_0 : i32, i32
  }
  func.func @transform_4(%arg0: i32) -> (i32, i32) {
    %c0_i32 = arith.constant 0 : i32
    %c0_i32_0 = arith.constant 0 : i32
    %c0_i32_1 = arith.constant 0 : i32
    return %c0_i32, %c0_i32_0 : i32, i32
  }
  func.func @transform_5(%arg0: i32) -> (i32, i32) {
    %c0_i32 = arith.constant 0 : i32
    %c0_i32_0 = arith.constant 0 : i32
    return %arg0, %c0_i32 : i32, i32
  }
}

</mosaic_0001>

<llo_original>
// kernel: tpu_custom_call.1
$region0: #{tpu_custom_call.1}
  #allocation0 [shape = 'u32[]', space=smem, size = 0x4, offset = 0x4, fixed_abs, tag = 'smem constant byte address 0x4 - core index']
  #allocation1 [shape = 'u32[72,128]{1,0:T(1,128)}', space=vmem, size = 0x9000, scoped, tag = 'internal scratch']
  #allocation2 [shape = 'f32[16,32]{1,0:T(8,128)}', space=vmem, size = 0x2000, scoped, tag = 'scratch operand']
  %s0 = inlined_call_operand.vmem [shape: f32[16,32], index: 0, kind: input, shape index: {}]
  %s1 = inlined_call_operand.vmem [shape: f32[32,64], index: 1, kind: input, shape index: {}]
  %s2 = inlined_call_operand.vmem [shape: f32[1,64], index: 2, kind: input, shape index: {}]
  %s3 = inlined_call_operand.vmem [shape: f32[64,32], index: 3, kind: input, shape index: {}]
  %s4 = inlined_call_operand.vmem [shape: f32[1,32], index: 4, kind: input, shape index: {}]
  %s5 = inlined_call_operand.hbm [shape: f32[16,32], index: 5, kind: output, shape index: {}]
  %s6 = sld [smem:[#allocation0]]
  $region30: #{tpu_custom_call.1} parent=0
    _
  %s8 = ssub.s32 1, %s6
  %s9 = scalar_select 0, %s8, %s6
  $region1: #{tpu_custom_call.1} parent=0
    #allocation3 [shape = 'u8[8192]{0}', space=vmem, size = 0x2000, scoped, tag = 'output window, operand 0, single buffered']
    #allocation4 [shape = 's32[1]{0}', space=sflag, size = 0x4, scoped, tag = 'scoped memory for tpu_custom_call.1']
    %10 = vsyncpa [#allocation4], 0
    // Predicated region
    $region2: #{tpu_custom_call.1} parent=1 // pred_check
      _
    $region3: #{tpu_custom_call.1} parent=1 // pred_check_branch
      %12 = sbr.rel (0) target = $region5
    $region4: #{tpu_custom_call.1} parent=1 // pred_region
      _
    $region5: #{tpu_custom_call.1} parent=1 // pred_fallthru
      _
    // Predicated region
    $region6: #{tpu_custom_call.1} parent=1 // pred_check
      _
    $region7: #{tpu_custom_call.1} parent=1 // pred_check_branch
      %14 = sbr.rel (0) target = $region9
    $region8: #{tpu_custom_call.1} parent=1 // pred_region
      _
    $region9: #{tpu_custom_call.1} parent=1 // pred_fallthru
      _
    // Predicated region
    $region10: #{tpu_custom_call.1} parent=1 // pred_check
      _
    $region11: #{tpu_custom_call.1} parent=1 // pred_check_branch
      %16 = sbr.rel (0) target = $region13
    $region12: #{tpu_custom_call.1} parent=1 // pred_region
      _
    $region13: #{tpu_custom_call.1} parent=1 // pred_fallthru
      _
    // Predicated region
    $region14: #{tpu_custom_call.1} parent=1 // pred_check
      _
    $region15: #{tpu_custom_call.1} parent=1 // pred_check_branch
      %18 = sbr.rel (0) target = $region17
    $region16: #{tpu_custom_call.1} parent=1 // pred_region
      _
    $region17: #{tpu_custom_call.1} parent=1 // pred_fallthru
      _
    // Predicated region
    $region18: #{tpu_custom_call.1} parent=1 // pred_check
      _
    $region19: #{tpu_custom_call.1} parent=1 // pred_check_branch
      %20 = sbr.rel (0) target = $region21
    $region20: #{tpu_custom_call.1} parent=1 // pred_region
      _
    $region21: #{tpu_custom_call.1} parent=1 // pred_fallthru
      _
    %vm21 = vcmask 261120
    %22 = vst.msk [vmem:[#allocation2] sm:$0xff] %vm21, 0.0
    %23 = vst.msk [vmem:[#allocation2 + $0x8] sm:$0xff] %vm21, 0.0
    %v24 = vld [vmem:[%s0] sm:$0xff]
    %v25 = vld [vmem:[%s0 + $0x8] sm:$0xff]
    %v26 = vld [vmem:[%s1] sm:$0xff]
    %v27 = vld [vmem:[%s1 + $0x8] sm:$0xff]
    %v28 = vld [vmem:[%s1 + $0x10] sm:$0xff]
    %v29 = vld [vmem:[%s1 + $0x18] sm:$0xff]
    %v30 = vld [vmem:[%s2] sm:$0x1]
    %v32 = vperm.slane %v30, 0
    %v35 = vsel %vm21, %v24, 0
    %v38 = vsel %vm21, %v25, 0
    %40 = vmatpush.msra.mxu0 0.0
    %41 = vmatpush.msra.mxu0 0.0
    %42 = vmatpush.msra.mxu0 0.0
    %43 = vmatpush.msra.mxu0 0.0
    %44 = vmatpush.msra.mxu0 0.0
    %45 = vmatpush.msra.mxu0 0.0
    %46 = vmatpush.msra.mxu0 0.0
    %47 = vmatpush.msra.mxu0 0.0
    %48 = vmatpush.msra.mxu0 0.0
    %49 = vmatpush.msra.mxu0 0.0
    %50 = vmatpush.msra.mxu0 0.0
    %51 = vmatpush.msra.mxu0 0.0
    %52 = vmatpush.msra.mxu0 %v29
    %53 = vmatpush.msra.mxu0 %v28
    %54 = vmatpush.msra.mxu0 %v27
    %55 = vmatpush.msra.mxu0 %v26
    %56 = vmatmul.f32.gmra.mxu0 %v35
    %v57 = vpop.f32.mrf.mxu0
    %v58 = vadd.f32 %v32, %v57
    %59 = vmatmul.f32.gmra.mxu0 %v38
    %v60 = vpop.f32.mrf.mxu0
    %v61 = vadd.f32 %v32, %v60
    %62 = vdwg.mxu0
    %v63 = vmax.f32 %v58, 0.0
    %v64 = vmax.f32 %v61, 0.0
    %v65 = vld [vmem:[#allocation2] sm:$0xff]
    %v66 = vld [vmem:[#allocation2 + $0x8] sm:$0xff]
    %v67 = vld [vmem:[%s3] sm:$0xff]
    %v68 = vld [vmem:[%s3 + $0x8] sm:$0xff]
    %v69 = vld [vmem:[%s3 + $0x10] sm:$0xff]
    %v70 = vld [vmem:[%s3 + $0x18] sm:$0xff]
    %v71 = vld [vmem:[%s3 + $0x20] sm:$0xff]
    %v72 = vld [vmem:[%s3 + $0x28] sm:$0xff]
    %v73 = vld [vmem:[%s3 + $0x30] sm:$0xff]
    %v74 = vld [vmem:[%s3 + $0x38] sm:$0xff]
    %vm75 = vcmask 523264
    %v77 = vsel %vm75, %v63, 0
    %v80 = vsel %vm75, %v64, 0
    %82 = vmatpush.msra.mxu0 0.0
    %83 = vmatpush.msra.mxu0 0.0
    %84 = vmatpush.msra.mxu0 0.0
    %85 = vmatpush.msra.mxu0 0.0
    %86 = vmatpush.msra.mxu0 0.0
    %87 = vmatpush.msra.mxu0 0.0
    %88 = vmatpush.msra.mxu0 0.0
    %89 = vmatpush.msra.mxu0 0.0
    %90 = vmatpush.msra.mxu0 %v74
    %91 = vmatpush.msra.mxu0 %v73
    %92 = vmatpush.msra.mxu0 %v72
    %93 = vmatpush.msra.mxu0 %v71
    %94 = vmatpush.msra.mxu0 %v70
    %95 = vmatpush.msra.mxu0 %v69
    %96 = vmatpush.msra.mxu0 %v68
    %97 = vmatpush.msra.mxu0 %v67
    %98 = vmatmul.f32.gmra.mxu0 %v77
    %v99 = vpop.f32.mrf.mxu0
    %v100 = vadd.f32 0.0, %v99
    %101 = vmatmul.f32.gmra.mxu0 %v80
    %v102 = vpop.f32.mrf.mxu0
    %v103 = vadd.f32 0.0, %v102
    %104 = vdwg.mxu0
    %v105 = vadd.f32 %v65, %v100
    %v106 = vadd.f32 %v66, %v103
    %107 = vst.msk [vmem:[#allocation2] sm:$0xff] %vm21, %v105
    %108 = vst.msk [vmem:[#allocation2 + $0x8] sm:$0xff] %vm21, %v106
    %v109 = vld [vmem:[#allocation2] sm:$0xff]
    %v110 = vld [vmem:[#allocation2 + $0x8] sm:$0xff]
    %v111 = vld [vmem:[%s4] sm:$0x1]
    %v113 = vperm.slane %v111, 0
    %v115 = vadd.f32 %v109, %v113
    %v116 = vadd.f32 %v110, %v113
    %117 = vst.msk [vmem:[#allocation3] sm:$0xff] %vm21, %v115
    %118 = vst.msk [vmem:[#allocation3 + $0x8] sm:$0xff] %vm21, %v116
    // Predicated region
    $region22: #{tpu_custom_call.1} parent=1 // pred_check
      _
    $region23: #{tpu_custom_call.1} parent=1 // pred_check_branch
      %120 = sbr.rel (0) target = $region25
    $region24: #{tpu_custom_call.1} parent=1 // pred_region
      %122 = vsyncadd [#allocation4], 0
      %s123 = sshll.u32 [#allocation3], 4
      %s124 = int_to_ptr.vmem [resolvable:$true] %s123
      %s125 = sshll.u32 %s5, 4
      %s126 = int_to_ptr.hbm [resolvable:$true] %s125
      %131 = dma.vmem_to_hbm [thread:$0]  %s124, 256, %s126, [#allocation4], 128, 128, 8
    $region25: #{tpu_custom_call.1} parent=1 // pred_fallthru
      _
    // Predicated region
    $region26: #{tpu_custom_call.1} parent=1 // pred_check
      _
    $region27: #{tpu_custom_call.1} parent=1 // pred_check_branch
      %133 = sbr.rel (0) target = $region29
    $region28: #{tpu_custom_call.1} parent=1 // pred_region
      %135 = dma.done [#allocation4], 256
    $region29: #{tpu_custom_call.1} parent=1 // pred_fallthru
      _
    %136 = vsyncpa [#allocation4], 1

</llo_original>
